<compile_context>
chip_gen: v5e
topology: v5e:2x2
jax: 0.10.0
libtpu: 0.0.40
codegen_flags: <defaults>
</compile_context>

<pallas_src>
import functools

import jax
import jax.numpy as jnp
from jax.experimental import pallas as pl
from jax.experimental.pallas import tpu as pltpu


# --------------------------------------------------------------------------------------
# in-kernel helpers
# --------------------------------------------------------------------------------------
def _smooth_pool_raw(x, w_idx, kernel_size, W):
    """Separable k x k, stride-1, 'same' box SUM (zeros outside the image, no divide).

    x     : (cb, H*W) f32   flattened spatial on the lane axis
    w_idx : (1,  H*W) i32   column index (j % W), precomputed in the wrapper
    """
    cb, HW = x.shape
    pad = kernel_size // 2

    # Horizontal pass: shifts along the flattened axis, masked at row boundaries.
    # The compare runs on the (1, HW) index plane; only the select broadcasts.
    hsum = x
    for d in range(1, pad + 1):
        zcol = jnp.zeros((cb, d), jnp.float32)
        right = jnp.concatenate([x[:, d:], zcol], axis=1)            # x[., j + d]
        right = jnp.where(w_idx <= (W - 1 - d), right, 0.0)
        left = jnp.concatenate([zcol, x[:, :HW - d]], axis=1)        # x[., j - d]
        left = jnp.where(w_idx >= d, left, 0.0)
        hsum = hsum + right + left

    # Vertical pass: shifts by whole rows (d*W); out-of-range rows are the zero fill.
    vsum = hsum
    for d in range(1, pad + 1):
        zrow = jnp.zeros((cb, d * W), jnp.float32)
        down = jnp.concatenate([hsum[:, d * W:], zrow], axis=1)      # row h + d
        up = jnp.concatenate([zrow, hsum[:, :HW - d * W]], axis=1)   # row h - d
        vsum = vsum + down + up

    return vsum


def _how_head_whiten_kernel(kernel_size, W,
                            x_ref, w_ref, b_ref, invc_ref, widx_ref,
                            feat_ref, attn_ref, acc_ref):
    """Grid = (batch, channel_blocks); channel blocks are a reduction axis.

    x_ref    : (1, c_blk, HW)   input slice (channels-leading, flat spatial)
    w_ref    : (OUT, c_blk)     1x1-conv weight slice
    b_ref    : (OUT, 1)         bias
    invc_ref : (1, HW)          reciprocal pooling counts (count_include_pad=False)
    widx_ref : (1, HW)          column index (j % W)
    feat_ref : (1, OUT, HW)     whitened pooled features (written on last c block)
    attn_ref : (1, 1, HW)       L2 attention (accumulated across c blocks)
    acc_ref  : (OUT, HW) f32    VMEM matmul accumulator (unnormalized pooled sums)
    """
    c = pl.program_id(1)
    nc = pl.num_programs(1)

    x = x_ref[0].astype(jnp.float32)                     # (c_blk, HW)
    ss = jnp.sum(x * x, axis=0, keepdims=True)           # (1, HW) partial sum of squares

    @pl.when(c == 0)
    def _init():
        attn_ref[0] = jnp.zeros_like(ss)
        acc_ref[...] = jnp.zeros_like(acc_ref)

    # L2 attention: running channel sum of squares on the *unpooled* input.
    attn_ref[0] = attn_ref[0] + ss

    # Unnormalized smoothing box sum + partial 1x1 conv (MXU), f32 accumulation.
    # The per-position 1/count scale commutes with the channel matmul, so it is
    # deferred to the (OUT, HW) finalize instead of scaling every (c_blk, HW) block.
    pooled = _smooth_pool_raw(x, widx_ref[...], kernel_size, W)
    acc_ref[...] += jnp.dot(w_ref[...].astype(jnp.float32), pooled,
                            preferred_element_type=jnp.float32)

    @pl.when(c == nc - 1)
    def _finalize():
        feat = acc_ref[...] * invc_ref[...] + b_ref[...].astype(jnp.float32)
        feat_ref[0] = feat.astype(feat_ref.dtype)
        attn_ref[0] = jnp.sqrt(attn_ref[0] + 1e-10)


def _how_head_pool_kernel(kernel_size, W,
                          x_ref, invc_ref, widx_ref, feat_ref, attn_ref):
    """do_whitening=False variant: no weight block, no identity matmul — the pooled
    channel block (normalized here, since each block is its own output) is written
    straight to its output slice."""
    c = pl.program_id(1)
    nc = pl.num_programs(1)

    x = x_ref[0].astype(jnp.float32)
    ss = jnp.sum(x * x, axis=0, keepdims=True)

    @pl.when(c == 0)
    def _init():
        attn_ref[0] = jnp.zeros_like(ss)

    attn_ref[0] = attn_ref[0] + ss
    feat_ref[0] = (_smooth_pool_raw(x, widx_ref[...], kernel_size, W)
                   * invc_ref[...]).astype(feat_ref.dtype)

    @pl.when(c == nc - 1)
    def _finalize():
        attn_ref[0] = jnp.sqrt(attn_ref[0] + 1e-10)


# --------------------------------------------------------------------------------------
# wrapper
# --------------------------------------------------------------------------------------
def _pick_c_block(C, HW, itemsize, target_bytes=4 * 1024 * 1024):
    """Whole C if small; otherwise the largest multiple-of-128 divisor whose
    (c_blk, HW) tile stays under ~target_bytes (keeps VMEM bounded for big C)."""
    if C * HW * itemsize <= 2 * target_bytes or C % 128 != 0:
        return C
    fitting = [b for b in range(128, C + 1, 128)
               if C % b == 0 and b * HW * itemsize <= target_bytes]
    return max(fitting) if fitting else 128


def how_head_forward(x_nchw, whiten_w_oc=None, whiten_b=None, kernel_size=3,
                     do_whitening=True):
    """JAX/Pallas equivalent of HowHead.forward.

    x_nchw      : (N, C, H, W)
    whiten_w_oc : (OUT, C)   1x1 conv weight (PyTorch (OUT, C, 1, 1) squeezed)
    whiten_b    : (OUT,)     bias
    Returns {'features': (N, OUT, H, W)  [or (N, C, H, W) if not whitening],
             'attns'   : (N, H, W) with dim 0 squeezed when N == 1}
    """
    if kernel_size % 2 != 1:
        raise ValueError("stride-1 shape-preserving SmoothingAvgPooling needs odd "
                         "kernel_size")
    N, C, H, W = x_nchw.shape
    HW = H * W
    pad = kernel_size // 2

    # NCHW -> (N, C, H*W): pure reshape, no transpose.
    x_flat = x_nchw.reshape(N, C, HW)

    # Analytic count_include_pad=False divisors + column-index plane (built once).
    hh = jnp.arange(H, dtype=jnp.int32)
    ww = jnp.arange(W, dtype=jnp.int32)
    vr = jnp.minimum(hh, pad) + jnp.minimum(H - 1 - hh, pad) + 1
    vc = jnp.minimum(ww, pad) + jnp.minimum(W - 1 - ww, pad) + 1
    inv_cnt = (1.0 / (vr[:, None] * vc[None, :]).astype(jnp.float32)).reshape(1, HW)
    w_idx = jnp.broadcast_to(ww[None, :], (H, W)).reshape(1, HW)

    c_blk = _pick_c_block(C, HW, x_nchw.dtype.itemsize)
    nc = C // c_blk
    grid = (N, nc)

    x_spec = pl.BlockSpec((1, c_blk, HW), lambda n, c: (n, c, 0))
    invc_spec = pl.BlockSpec((1, HW), lambda n, c: (0, 0))
    widx_spec = pl.BlockSpec((1, HW), lambda n, c: (0, 0))
    attn_spec = pl.BlockSpec((1, 1, HW), lambda n, c: (n, 0, 0))

    if do_whitening:
        out_dim = whiten_w_oc.shape[0]
        w = whiten_w_oc.astype(jnp.float32)                      # (OUT, C)
        b = whiten_b.reshape(out_dim, 1).astype(jnp.float32)     # (OUT, 1)
        kern = functools.partial(_how_head_whiten_kernel, kernel_size, W)
        vmem_est = 4 * (10 * c_blk * HW + 3 * out_dim * HW
                        + 2 * out_dim * c_blk + 4 * HW)
        feat_flat, attn_flat = pl.pallas_call(
            kern,
            out_shape=(jax.ShapeDtypeStruct((N, out_dim, HW), x_nchw.dtype),
                       jax.ShapeDtypeStruct((N, 1, HW), jnp.float32)),
            grid=grid,
            in_specs=[x_spec,
                      pl.BlockSpec((out_dim, c_blk), lambda n, c: (0, c)),
                      pl.BlockSpec((out_dim, 1), lambda n, c: (0, 0)),
                      invc_spec, widx_spec],
            out_specs=(pl.BlockSpec((1, out_dim, HW), lambda n, c: (n, 0, 0)),
                       attn_spec),
            scratch_shapes=[pltpu.VMEM((out_dim, HW), jnp.float32)],
            compiler_params=pltpu.CompilerParams(
                dimension_semantics=("parallel", "arbitrary"),
                vmem_limit_bytes=int(min(64 * 2**20, max(32 * 2**20, 2 * vmem_est)))),
        )(x_flat, w, b, inv_cnt, w_idx)
        features = feat_flat.reshape(N, out_dim, H, W)
    else:
        kern = functools.partial(_how_head_pool_kernel, kernel_size, W)
        vmem_est = 4 * (12 * c_blk * HW + 4 * HW)
        feat_flat, attn_flat = pl.pallas_call(
            kern,
            out_shape=(jax.ShapeDtypeStruct((N, C, HW), x_nchw.dtype),
                       jax.ShapeDtypeStruct((N, 1, HW), jnp.float32)),
            grid=grid,
            in_specs=[x_spec, invc_spec, widx_spec],
            out_specs=(pl.BlockSpec((1, c_blk, HW), lambda n, c: (n, c, 0)),
                       attn_spec),
            compiler_params=pltpu.CompilerParams(
                dimension_semantics=("parallel", "arbitrary"),
                vmem_limit_bytes=int(min(64 * 2**20, max(32 * 2**20, 2 * vmem_est)))),
        )(x_flat, inv_cnt, w_idx)
        features = feat_flat.reshape(N, C, H, W)

    attns = attn_flat.reshape(N, H, W)
    attns = jnp.squeeze(attns, axis=0) if N == 1 else attns   # torch .squeeze(0)
    return {"features": features, "attns": attns}


# --------------------------------------------------------------------------------------
# pure-JAX reference (for checking)
# --------------------------------------------------------------------------------------
def _ref_forward(x_nchw, whiten_w_oc=None, whiten_b=None, kernel_size=3,
                 do_whitening=True):
    N, C, H, W = x_nchw.shape
    xf = x_nchw.astype(jnp.float32)
    attn = jnp.sqrt(jnp.sum(xf ** 2, axis=1) + 1e-10)
    if N == 1:
        attn = jnp.squeeze(attn, axis=0)
    pad = kernel_size // 2
    xp = jnp.pad(xf, ((0, 0), (0, 0), (pad, pad), (pad, pad)))
    op = jnp.pad(jnp.ones((1, 1, H, W), jnp.float32),
                 ((0, 0), (0, 0), (pad, pad), (pad, pad)))
    acc = jnp.zeros((N, C, H, W), jnp.float32)
    cnt = jnp.zeros((1, 1, H, W), jnp.float32)
    for dy in range(kernel_size):
        for dx in range(kernel_size):
            acc = acc + xp[:, :, dy:dy + H, dx:dx + W]
            cnt = cnt + op[:, :, dy:dy + H, dx:dx + W]
    pooled = acc / cnt
    if not do_whitening:
        return {"features": pooled.astype(x_nchw.dtype), "attns": attn}
    feat = jnp.einsum("nchw,oc->nohw", pooled, whiten_w_oc,
                      preferred_element_type=jnp.float32) \
        + whiten_b[None, :, None, None]
    return {"features": feat.astype(x_nchw.dtype), "attns": attn}


if __name__ == "__main__":
    key = jax.random.PRNGKey(0)
    k_x, k_w = jax.random.split(key)

    # small shapes consistent with the module
    N, INP_DIM, H, W = 2, 16, 16, 16
    OUT_DIM, KERNEL_SIZE = 32, 3

    x = jax.random.normal(k_x, (N, INP_DIM, H, W), dtype=jnp.float32)

    # Conv2d(inp_dim, out_dim, 1x1) parameters; reset_parameters zeroes the bias.
    whiten_w_oc = 0.05 * jax.random.normal(
        k_w, (OUT_DIM, INP_DIM), dtype=jnp.float32)       # PyTorch (out, in) layout
    whiten_b = jnp.zeros((OUT_DIM,), dtype=jnp.float32)

    out = how_head_forward(x, whiten_w_oc, whiten_b,
                           kernel_size=KERNEL_SIZE, do_whitening=True)
    jax.block_until_ready(out["features"])
    jax.block_until_ready(out["attns"])

    ref = _ref_forward(x, whiten_w_oc, whiten_b, kernel_size=KERNEL_SIZE)
    assert out["features"].shape == (N, OUT_DIM, H, W)
    assert out["attns"].shape == (N, H, W)
    assert jnp.allclose(out["features"], ref["features"], rtol=1e-4, atol=1e-5)
    assert jnp.allclose(out["attns"], ref["attns"], rtol=1e-4, atol=1e-5)

    # do_whitening=False path (no identity matmul — pooled features written directly)
    out2 = how_head_forward(x, kernel_size=KERNEL_SIZE, do_whitening=False)
    jax.block_until_ready(out2["features"])
    ref2 = _ref_forward(x, kernel_size=KERNEL_SIZE, do_whitening=False)
    assert out2["features"].shape == (N, INP_DIM, H, W)
    assert jnp.allclose(out2["features"], ref2["features"], rtol=1e-4, atol=1e-5)
    assert jnp.allclose(out2["attns"], ref2["attns"], rtol=1e-4, atol=1e-5)

    print("KERNEL_OK")
</pallas_src>

<mosaic_0001>
module attributes {stable_mosaic.version = 11 : i64} {
  func.func @_how_head_whiten_kernel(%arg0: i32, %arg1: i32, %arg2: memref<1x16x256xf32, #tpu.memory_space<vmem>>, %arg3: memref<32x16xf32, #tpu.memory_space<vmem>>, %arg4: memref<32x1xf32, #tpu.memory_space<vmem>>, %arg5: memref<1x256xf32, #tpu.memory_space<vmem>>, %arg6: memref<1x256xi32, #tpu.memory_space<vmem>>, %arg7: memref<1x32x256xf32, #tpu.memory_space<vmem>>, %arg8: memref<1x1x256xf32, #tpu.memory_space<vmem>>, %arg9: memref<32x256xf32, #tpu.memory_space<vmem>>) attributes {dimension_semantics = [#tpu.dimension_semantics<parallel>, #tpu.dimension_semantics<arbitrary>], iteration_bounds = array<i64: 2, 1>, scalar_prefetch = 0 : i64, scratch_operands = 1 : i64, tpu.core_type = #tpu.core_type<tc>, window_params = [{transform_indices = @transform_0, window_bounds = array<i64: 1, 16, 256>}, {transform_indices = @transform_1, window_bounds = array<i64: 32, 16>}, {pipeline_mode = #tpu.pipeline_mode<synchronous>, transform_indices = @transform_2, window_bounds = array<i64: 32, 1>}, {pipeline_mode = #tpu.pipeline_mode<synchronous>, transform_indices = @transform_3, window_bounds = array<i64: 1, 256>}, {pipeline_mode = #tpu.pipeline_mode<synchronous>, transform_indices = @transform_4, window_bounds = array<i64: 1, 256>}, {transform_indices = @transform_5, window_bounds = array<i64: 1, 32, 256>}, {transform_indices = @transform_6, window_bounds = array<i64: 1, 1, 256>}]} {
    %c0 = arith.constant 0 : index
    %c0_0 = arith.constant 0 : index
    %c0_1 = arith.constant 0 : index
    %0 = vector.load %arg2[%c0, %c0_0, %c0_1] : memref<1x16x256xf32, #tpu.memory_space<vmem>>, vector<1x16x256xf32>
    %1 = vector.shape_cast %0 : vector<1x16x256xf32> to vector<16x256xf32>
    %2 = arith.mulf %1, %1 : vector<16x256xf32>
    %cst = arith.constant dense<0.000000e+00> : vector<256xf32>
    %3 = vector.multi_reduction <add>, %2, %cst [0] : vector<16x256xf32> to vector<256xf32>
    %4 = vector.shape_cast %3 : vector<256xf32> to vector<1x256xf32>
    %c0_i32 = arith.constant 0 : i32
    %5 = arith.cmpi eq, %arg1, %c0_i32 : i32
    %6 = arith.extui %5 : i1 to i32
    %c0_i32_2 = arith.constant 0 : i32
    %7 = arith.cmpi ne, %6, %c0_i32_2 : i32
    scf.if %7 {
      %cst_24 = arith.constant 0.000000e+00 : f32
      %49 = vector.broadcast %cst_24 : f32 to vector<1x256xf32>
      %c0_25 = arith.constant 0 : index
      %c0_26 = arith.constant 0 : index
      %c0_27 = arith.constant 0 : index
      %50 = vector.load %arg8[%c0_25, %c0_26, %c0_27] : memref<1x1x256xf32, #tpu.memory_space<vmem>>, vector<1x1x256xf32>
      %51 = vector.shape_cast %50 : vector<1x1x256xf32> to vector<1x256xf32>
      %52 = vector.shape_cast %49 : vector<1x256xf32> to vector<1x1x256xf32>
      tpu.vector_store %arg8[%c0_25, %c0_26, %c0_27], %52 {strides = array<i32>} : memref<1x1x256xf32, #tpu.memory_space<vmem>>, vector<1x1x256xf32>,
      %cst_28 = arith.constant 0.000000e+00 : f32
      %53 = vector.broadcast %cst_28 : f32 to vector<32x256xf32>
      %c0_29 = arith.constant 0 : index
      %c0_30 = arith.constant 0 : index
      %54 = vector.load %arg9[%c0_29, %c0_30] : memref<32x256xf32, #tpu.memory_space<vmem>>, vector<32x256xf32>
      tpu.vector_store %arg9[%c0_29, %c0_30], %53 {strides = array<i32>} : memref<32x256xf32, #tpu.memory_space<vmem>>, vector<32x256xf32>,
    } else {
    }
    %c0_3 = arith.constant 0 : index
    %c0_4 = arith.constant 0 : index
    %c0_5 = arith.constant 0 : index
    %8 = vector.load %arg8[%c0_3, %c0_4, %c0_5] : memref<1x1x256xf32, #tpu.memory_space<vmem>>, vector<1x1x256xf32>
    %9 = vector.shape_cast %8 : vector<1x1x256xf32> to vector<1x256xf32>
    %10 = arith.addf %9, %4 : vector<1x256xf32>
    %c0_6 = arith.constant 0 : index
    %c0_7 = arith.constant 0 : index
    %c0_8 = arith.constant 0 : index
    %11 = vector.load %arg8[%c0_6, %c0_7, %c0_8] : memref<1x1x256xf32, #tpu.memory_space<vmem>>, vector<1x1x256xf32>
    %12 = vector.shape_cast %11 : vector<1x1x256xf32> to vector<1x256xf32>
    %13 = vector.shape_cast %10 : vector<1x256xf32> to vector<1x1x256xf32>
    tpu.vector_store %arg8[%c0_6, %c0_7, %c0_8], %13 {strides = array<i32>} : memref<1x1x256xf32, #tpu.memory_space<vmem>>, vector<1x1x256xf32>,
    %c0_9 = arith.constant 0 : index
    %c0_10 = arith.constant 0 : index
    %14 = vector.load %arg6[%c0_9, %c0_10] : memref<1x256xi32, #tpu.memory_space<vmem>>, vector<1x256xi32>
    %cst_11 = arith.constant 0.000000e+00 : f32
    %15 = vector.broadcast %cst_11 : f32 to vector<16x1xf32>
    %16 = vector.extract_strided_slice %1 {offsets = [0, 1], sizes = [16, 255], strides = [1, 1]} : vector<16x256xf32> to vector<16x255xf32>
    %17 = tpu.concatenate %16, %15 in 1 : vector<16x255xf32>, vector<16x1xf32> -> vector<16x256xf32>
    %c14_i32 = arith.constant 14 : i32
    %18 = vector.broadcast %c14_i32 : i32 to vector<1x256xi32>
    %19 = arith.cmpi sle, %14, %18 : vector<1x256xi32>
    %cst_12 = arith.constant 0.000000e+00 : f32
    %20 = vector.shape_cast %19 : vector<1x256xi1> to vector<1x256xi1>
    %21 = vector.broadcast %20 : vector<1x256xi1> to vector<16x256xi1>
    %22 = vector.broadcast %cst_12 : f32 to vector<16x256xf32>
    %23 = arith.select %21, %17, %22 : vector<16x256xi1>, vector<16x256xf32>
    %24 = vector.extract_strided_slice %1 {offsets = [0, 0], sizes = [16, 255], strides = [1, 1]} : vector<16x256xf32> to vector<16x255xf32>
    %25 = tpu.concatenate %15, %24 in 1 : vector<16x1xf32>, vector<16x255xf32> -> vector<16x256xf32>
    %c1_i32 = arith.constant 1 : i32
    %26 = vector.broadcast %c1_i32 : i32 to vector<1x256xi32>
    %27 = arith.cmpi sge, %14, %26 : vector<1x256xi32>
    %cst_13 = arith.constant 0.000000e+00 : f32
    %28 = vector.shape_cast %27 : vector<1x256xi1> to vector<1x256xi1>
    %29 = vector.broadcast %28 : vector<1x256xi1> to vector<16x256xi1>
    %30 = vector.broadcast %cst_13 : f32 to vector<16x256xf32>
    %31 = arith.select %29, %25, %30 : vector<16x256xi1>, vector<16x256xf32>
    %32 = arith.addf %1, %23 : vector<16x256xf32>
    %33 = arith.addf %32, %31 : vector<16x256xf32>
    %cst_14 = arith.constant 0.000000e+00 : f32
    %34 = vector.broadcast %cst_14 : f32 to vector<16x16xf32>
    %35 = vector.extract_strided_slice %33 {offsets = [0, 16], sizes = [16, 240], strides = [1, 1]} : vector<16x256xf32> to vector<16x240xf32>
    %36 = tpu.concatenate %35, %34 in 1 : vector<16x240xf32>, vector<16x16xf32> -> vector<16x256xf32>
    %37 = vector.extract_strided_slice %33 {offsets = [0, 0], sizes = [16, 240], strides = [1, 1]} : vector<16x256xf32> to vector<16x240xf32>
    %38 = tpu.concatenate %34, %37 in 1 : vector<16x16xf32>, vector<16x240xf32> -> vector<16x256xf32>
    %39 = arith.addf %33, %36 : vector<16x256xf32>
    %40 = arith.addf %39, %38 : vector<16x256xf32>
    %c0_15 = arith.constant 0 : index
    %c0_16 = arith.constant 0 : index
    %41 = vector.load %arg9[%c0_15, %c0_16] : memref<32x256xf32, #tpu.memory_space<vmem>>, vector<32x256xf32>
    %c0_17 = arith.constant 0 : index
    %c0_18 = arith.constant 0 : index
    %42 = vector.load %arg3[%c0_17, %c0_18] : memref<32x16xf32, #tpu.memory_space<vmem>>, vector<32x16xf32>
    %cst_19 = arith.constant dense<0.000000e+00> : vector<32x256xf32>
    %43 = tpu.matmul %42, %40, %cst_19 {dimension_numbers = #tpu.dot_dimension_numbers<[1], [0], [0], [1], [0, 0, 1, 1], [], []>} : vector<32x16xf32>, vector<16x256xf32>, vector<32x256xf32> -> vector<32x256xf32>
    %44 = arith.addf %41, %43 : vector<32x256xf32>
    %c0_20 = arith.constant 0 : index
    %c0_21 = arith.constant 0 : index
    %45 = vector.load %arg9[%c0_20, %c0_21] : memref<32x256xf32, #tpu.memory_space<vmem>>, vector<32x256xf32>
    tpu.vector_store %arg9[%c0_20, %c0_21], %44 {strides = array<i32>} : memref<32x256xf32, #tpu.memory_space<vmem>>, vector<32x256xf32>,
    %c0_i32_22 = arith.constant 0 : i32
    %46 = arith.cmpi eq, %arg1, %c0_i32_22 : i32
    %47 = arith.extui %46 : i1 to i32
    %c0_i32_23 = arith.constant 0 : i32
    %48 = arith.cmpi ne, %47, %c0_i32_23 : i32
    scf.if %48 {
      %c0_24 = arith.constant 0 : index
      %c0_25 = arith.constant 0 : index
      %49 = vector.load %arg9[%c0_24, %c0_25] : memref<32x256xf32, #tpu.memory_space<vmem>>, vector<32x256xf32>
      %c0_26 = arith.constant 0 : index
      %c0_27 = arith.constant 0 : index
      %50 = vector.load %arg5[%c0_26, %c0_27] : memref<1x256xf32, #tpu.memory_space<vmem>>, vector<1x256xf32>
      %51 = vector.broadcast %50 : vector<1x256xf32> to vector<32x256xf32>
      %52 = arith.mulf %49, %51 : vector<32x256xf32>
      %c0_28 = arith.constant 0 : index
      %c0_29 = arith.constant 0 : index
      %53 = vector.load %arg4[%c0_28, %c0_29] : memref<32x1xf32, #tpu.memory_space<vmem>>, vector<32x1xf32>
      %54 = vector.broadcast %53 : vector<32x1xf32> to vector<32x256xf32>
      %55 = arith.addf %52, %54 : vector<32x256xf32>
      %c0_30 = arith.constant 0 : index
      %c0_31 = arith.constant 0 : index
      %c0_32 = arith.constant 0 : index
      %56 = vector.load %arg7[%c0_30, %c0_31, %c0_32] : memref<1x32x256xf32, #tpu.memory_space<vmem>>, vector<1x32x256xf32>
      %57 = vector.shape_cast %56 : vector<1x32x256xf32> to vector<32x256xf32>
      %58 = vector.shape_cast %55 : vector<32x256xf32> to vector<1x32x256xf32>
      tpu.vector_store %arg7[%c0_30, %c0_31, %c0_32], %58 {strides = array<i32>} : memref<1x32x256xf32, #tpu.memory_space<vmem>>, vector<1x32x256xf32>,
      %c0_33 = arith.constant 0 : index
      %c0_34 = arith.constant 0 : index
      %c0_35 = arith.constant 0 : index
      %59 = vector.load %arg8[%c0_33, %c0_34, %c0_35] : memref<1x1x256xf32, #tpu.memory_space<vmem>>, vector<1x1x256xf32>
      %60 = vector.shape_cast %59 : vector<1x1x256xf32> to vector<1x256xf32>
      %cst_36 = arith.constant 1.000000e-10 : f32
      %61 = vector.broadcast %cst_36 : f32 to vector<1x256xf32>
      %62 = arith.addf %60, %61 : vector<1x256xf32>
      %63 = math.sqrt %62 : vector<1x256xf32>
      %c0_37 = arith.constant 0 : index
      %c0_38 = arith.constant 0 : index
      %c0_39 = arith.constant 0 : index
      %64 = vector.load %arg8[%c0_37, %c0_38, %c0_39] : memref<1x1x256xf32, #tpu.memory_space<vmem>>, vector<1x1x256xf32>
      %65 = vector.shape_cast %64 : vector<1x1x256xf32> to vector<1x256xf32>
      %66 = vector.shape_cast %63 : vector<1x256xf32> to vector<1x1x256xf32>
      tpu.vector_store %arg8[%c0_37, %c0_38, %c0_39], %66 {strides = array<i32>} : memref<1x1x256xf32, #tpu.memory_space<vmem>>, vector<1x1x256xf32>,
    } else {
    }
    return
  }
  func.func @transform_0(%arg0: i32, %arg1: i32) -> (i32, i32, i32) {
    %c0_i32 = arith.constant 0 : i32
    %c0_i32_0 = arith.constant 0 : i32
    return %arg0, %arg1, %c0_i32 : i32, i32, i32
  }
  func.func @transform_1(%arg0: i32, %arg1: i32) -> (i32, i32) {
    %c0_i32 = arith.constant 0 : i32
    %c0_i32_0 = arith.constant 0 : i32
    return %c0_i32, %arg1 : i32, i32
  }
  func.func @transform_2(%arg0: i32, %arg1: i32) -> (i32, i32) {
    %c0_i32 = arith.constant 0 : i32
    %c0_i32_0 = arith.constant 0 : i32
    %c0_i32_1 = arith.constant 0 : i32
    return %c0_i32, %c0_i32_0 : i32, i32
  }
  func.func @transform_3(%arg0: i32, %arg1: i32) -> (i32, i32) {
    %c0_i32 = arith.constant 0 : i32
    %c0_i32_0 = arith.constant 0 : i32
    %c0_i32_1 = arith.constant 0 : i32
    return %c0_i32, %c0_i32_0 : i32, i32
  }
  func.func @transform_4(%arg0: i32, %arg1: i32) -> (i32, i32) {
    %c0_i32 = arith.constant 0 : i32
    %c0_i32_0 = arith.constant 0 : i32
    %c0_i32_1 = arith.constant 0 : i32
    return %c0_i32, %c0_i32_0 : i32, i32
  }
  func.func @transform_5(%arg0: i32, %arg1: i32) -> (i32, i32, i32) {
    %c0_i32 = arith.constant 0 : i32
    %c0_i32_0 = arith.constant 0 : i32
    %c0_i32_1 = arith.constant 0 : i32
    return %arg0, %c0_i32, %c0_i32_0 : i32, i32, i32
  }
  func.func @transform_6(%arg0: i32, %arg1: i32) -> (i32, i32, i32) {
    %c0_i32 = arith.constant 0 : i32
    %c0_i32_0 = arith.constant 0 : i32
    %c0_i32_1 = arith.constant 0 : i32
    return %arg0, %c0_i32, %c0_i32_0 : i32, i32, i32
  }
}

</mosaic_0001>

<llo_original>
// kernel: tpu_custom_call.1
$region0: #{tpu_custom_call.1}
  #allocation0 [shape = 'u32[]', space=smem, size = 0x4, offset = 0x4, fixed_abs, tag = 'smem constant byte address 0x4 - core index']
  #allocation1 [shape = 'u32[72,128]{1,0:T(1,128)}', space=vmem, size = 0x9000, scoped, tag = 'internal scratch']
  #allocation2 [shape = 'f32[32,256]{1,0:T(8,128)}', space=vmem, size = 0x8000, scoped, tag = 'scratch operand']
  %s0 = inlined_call_operand.vmem [shape: f32[2,16,256], index: 0, kind: input, shape index: {}]
  %s1 = inlined_call_operand.vmem [shape: f32[32,16], index: 1, kind: input, shape index: {}]
  %s2 = inlined_call_operand.vmem [shape: f32[32,1], index: 2, kind: input, shape index: {}]
  %s3 = inlined_call_operand.vmem [shape: f32[1,256], index: 3, kind: input, shape index: {}]
  %s4 = inlined_call_operand.vmem [shape: s32[1,256], index: 4, kind: input, shape index: {}]
  %s5 = inlined_call_operand.hbm [shape: f32[2,32,256], index: 5, kind: output, shape index: {0}]
  %s6 = inlined_call_operand.hbm [shape: f32[2,1,256], index: 6, kind: output, shape index: {1}]
  %7 = xla_tuple %s5, %s6
  %s8 = sld [smem:[#allocation0]]
  $region69: #{tpu_custom_call.1} parent=0
    _
  %s10 = ssub.s32 1, %s8
  %s11 = scalar_select 0, %s10, %s8
  $region1: #{tpu_custom_call.1} parent=0
    #allocation3 [shape = 'u8[65536]{0}', space=vmem, size = 0x10000, scoped, tag = 'output window, operand 0']
    #allocation4 [shape = 's32[2]{0}', space=sflag, size = 0x8, scoped, tag = 'scoped memory for tpu_custom_call.1']
    #allocation5 [shape = 'u8[2048]{0}', space=vmem, size = 0x800, scoped, tag = 'output window, operand 1']
    #allocation6 [shape = 's32[2]{0}', space=sflag, size = 0x8, scoped, tag = 'scoped memory for tpu_custom_call.1']
    %12 = vsyncpa [#allocation4], 0
    %s13 = scalar_lea.sflag [#allocation4], 1
    %14 = vsyncpa %s13, 0
    %15 = vsyncpa [#allocation6], 0
    %s16 = scalar_lea.sflag [#allocation6], 1
    %17 = vsyncpa %s16, 0
    loop: start=0, step=1, limit=4
    $region2: #{tpu_custom_call.1} parent=1 // loop_pre_header
      _
    $region3: #{tpu_custom_call.1} parent=1 // loop_header
      %s19 = sphi 0, %s23
      %p20 = scmp.ge.s32.totalorder %s19, 4
      %s26 = sphi 0, %s38
      %s27 = sphi 0, %s34
      %s28 = sphi 0, %s26
      %s29 = sphi 0, %s27
      %s30 = sphi 0, %s28
      %s31 = sphi 0, %s29
      %s43 = sphi 0, %s45
      %s46 = sphi 0, %s43
      %s47 = sphi 0, %s46
      %s63 = sphi 0, %s47
      %s69 = sphi 0, %s71
      %s72 = sphi 0, %s69
      %s73 = sphi 0, %s72
      %s89 = sphi 0, %s73
      %s93 = sphi 0, %s93
      %s95 = sphi 0, %s93
      %s96 = sphi 0, %s95
      %s110 = sphi 0, %s96
      %s114 = sphi 0, %s114
      %s116 = sphi 0, %s114
      %s117 = sphi 0, %s116
      %s131 = sphi 0, %s117
      %s135 = sphi 0, %s135
      %s137 = sphi 0, %s135
      %s138 = sphi 0, %s137
      %s152 = sphi 0, %s138
      %s158 = sphi 0, %s160
      %s161 = sphi 0, %s158
      %s162 = sphi 0, %s161
      %s178 = sphi 0, %s162
      %s184 = sphi 0, %s186
      %s187 = sphi 0, %s184
      %s188 = sphi 0, %s187
      %s204 = sphi 0, %s188
    $region4: #{tpu_custom_call.1} parent=1 // loop_header_branch
      %22 = sbr.rel (%p20) target = $region8
    $region5: #{tpu_custom_call.1} parent=1 // loop_body
      %s24 = ssub.s32 %s19, 1
      %s25 = ssub.s32 %s19, 2
      %s32 = sadd.s32 1, %s27
      %p33 = scmp.ge.s32.totalorder %s32, 1
      %s34 = scalar_select %p33, 0, %s32
      %s35 = sadd.s32 1, %s26
      %s36 = scalar_select %p33, %s35, %s26
      %p37 = scmp.ge.s32.totalorder %s36, 2
      %s38 = scalar_select %p37, 0, %s36
      %s39 = ssub.s32 %s26, %s38
      %s40 = ssub.s32 %s27, %s34
      %s41 = sor.u32 %s39, %s40
      %p42 = scmp.eq.s32.totalorder %s41, 0
      %s44 = sadd.s32 %s43, 1
      %s45 = scalar_select %p42, %s43, %s44
      %p48 = pneg %p42
      %p49 = scmp.eq.s32.totalorder %s19, 1
      %p50 = por %p48, %p49
      %p51 = scmp.ne.s32.totalorder %s43, %s46
      %p52 = scmp.eq.s32.totalorder %s19, 0
      %p53 = por %p51, %p52
      %p54 = scmp.ne.s32.totalorder %s43, %s46
      %p55 = scmp.eq.s32.totalorder %s24, 1
      %p56 = por %p54, %p55
      %p57 = scmp.ne.s32.totalorder %s46, %s47
      %p58 = scmp.eq.s32.totalorder %s24, 0
      %p59 = por %p57, %p58
      %p60 = scmp.ne.s32.totalorder %s46, %s47
      %p61 = scmp.eq.s32.totalorder %s25, 1
      %p62 = por %p60, %p61
      %p64 = scmp.ne.s32.totalorder %s47, %s63
      %p65 = scmp.eq.s32.totalorder %s25, 0
      %p66 = por %p64, %p65
      %s67 = ssub.s32 %s27, %s34
      %p68 = scmp.eq.s32.totalorder %s67, 0
      %s70 = sadd.s32 %s69, 1
      %s71 = scalar_select %p68, %s69, %s70
      %p74 = pneg %p68
      %p75 = scmp.eq.s32.totalorder %s19, 1
      %p76 = por %p74, %p75
      %p77 = scmp.ne.s32.totalorder %s69, %s72
      %p78 = scmp.eq.s32.totalorder %s19, 0
      %p79 = por %p77, %p78
      %p80 = scmp.ne.s32.totalorder %s69, %s72
      %p81 = scmp.eq.s32.totalorder %s24, 1
      %p82 = por %p80, %p81
      %p83 = scmp.ne.s32.totalorder %s72, %s73
      %p84 = scmp.eq.s32.totalorder %s24, 0
      %p85 = por %p83, %p84
      %p86 = scmp.ne.s32.totalorder %s72, %s73
      %p87 = scmp.eq.s32.totalorder %s25, 1
      %p88 = por %p86, %p87
      %p90 = scmp.ne.s32.totalorder %s73, %s89
      %p91 = scmp.eq.s32.totalorder %s25, 0
      %p92 = por %p90, %p91
      %s94 = sadd.s32 %s93, 1
      %p97 = scmp.eq.s32.totalorder %s19, 1
      %p98 = scmp.ne.s32.totalorder %s93, %s95
      %p99 = scmp.eq.s32.totalorder %s19, 0
      %p100 = por %p98, %p99
      %p101 = scmp.ne.s32.totalorder %s93, %s95
      %p102 = scmp.eq.s32.totalorder %s24, 1
      %p103 = por %p101, %p102
      %p104 = scmp.ne.s32.totalorder %s95, %s96
      %p105 = scmp.eq.s32.totalorder %s24, 0
      %p106 = por %p104, %p105
      %p107 = scmp.ne.s32.totalorder %s95, %s96
      %p108 = scmp.eq.s32.totalorder %s25, 1
      %p109 = por %p107, %p108
      %p111 = scmp.ne.s32.totalorder %s96, %s110
      %p112 = scmp.eq.s32.totalorder %s25, 0
      %p113 = por %p111, %p112
      %s115 = sadd.s32 %s114, 1
      %p118 = scmp.eq.s32.totalorder %s19, 1
      %p119 = scmp.ne.s32.totalorder %s114, %s116
      %p120 = scmp.eq.s32.totalorder %s19, 0
      %p121 = por %p119, %p120
      %p122 = scmp.ne.s32.totalorder %s114, %s116
      %p123 = scmp.eq.s32.totalorder %s24, 1
      %p124 = por %p122, %p123
      %p125 = scmp.ne.s32.totalorder %s116, %s117
      %p126 = scmp.eq.s32.totalorder %s24, 0
      %p127 = por %p125, %p126
      %p128 = scmp.ne.s32.totalorder %s116, %s117
      %p129 = scmp.eq.s32.totalorder %s25, 1
      %p130 = por %p128, %p129
      %p132 = scmp.ne.s32.totalorder %s117, %s131
      %p133 = scmp.eq.s32.totalorder %s25, 0
      %p134 = por %p132, %p133
      %s136 = sadd.s32 %s135, 1
      %p139 = scmp.eq.s32.totalorder %s19, 1
      %p140 = scmp.ne.s32.totalorder %s135, %s137
      %p141 = scmp.eq.s32.totalorder %s19, 0
      %p142 = por %p140, %p141
      %p143 = scmp.ne.s32.totalorder %s135, %s137
      %p144 = scmp.eq.s32.totalorder %s24, 1
      %p145 = por %p143, %p144
      %p146 = scmp.ne.s32.totalorder %s137, %s138
      %p147 = scmp.eq.s32.totalorder %s24, 0
      %p148 = por %p146, %p147
      %p149 = scmp.ne.s32.totalorder %s137, %s138
      %p150 = scmp.eq.s32.totalorder %s25, 1
      %p151 = por %p149, %p150
      %p153 = scmp.ne.s32.totalorder %s138, %s152
      %p154 = scmp.eq.s32.totalorder %s25, 0
      %p155 = por %p153, %p154
      %s156 = ssub.s32 %s26, %s38
      %p157 = scmp.eq.s32.totalorder %s156, 0
      %s159 = sadd.s32 %s158, 1
      %s160 = scalar_select %p157, %s158, %s159
      %p163 = pneg %p157
      %p164 = scmp.eq.s32.totalorder %s19, 1
      %p165 = por %p163, %p164
      %p166 = scmp.ne.s32.totalorder %s158, %s161
      %p167 = scmp.eq.s32.totalorder %s19, 0
      %p168 = por %p166, %p167
      %p169 = scmp.ne.s32.totalorder %s158, %s161
      %p170 = scmp.eq.s32.totalorder %s24, 1
      %p171 = por %p169, %p170
      %p172 = scmp.ne.s32.totalorder %s161, %s162
      %p173 = scmp.eq.s32.totalorder %s24, 0
      %p174 = por %p172, %p173
      %p175 = scmp.ne.s32.totalorder %s161, %s162
      %p176 = scmp.eq.s32.totalorder %s25, 1
      %p177 = por %p175, %p176
      %p179 = scmp.ne.s32.totalorder %s162, %s178
      %p180 = scmp.eq.s32.totalorder %s25, 0
      %p181 = por %p179, %p180
      %s182 = ssub.s32 %s26, %s38
      %p183 = scmp.eq.s32.totalorder %s182, 0
      %s185 = sadd.s32 %s184, 1
      %s186 = scalar_select %p183, %s184, %s185
      %p189 = pneg %p183
      %p190 = scmp.eq.s32.totalorder %s19, 1
      %p191 = por %p189, %p190
      %p192 = scmp.ne.s32.totalorder %s184, %s187
      %p193 = scmp.eq.s32.totalorder %s19, 0
      %p194 = por %p192, %p193
      %p195 = scmp.ne.s32.totalorder %s184, %s187
      %p196 = scmp.eq.s32.totalorder %s24, 1
      %p197 = por %p195, %p196
      %p198 = scmp.ne.s32.totalorder %s187, %s188
      %p199 = scmp.eq.s32.totalorder %s24, 0
      %p200 = por %p198, %p199
      %p201 = scmp.ne.s32.totalorder %s187, %s188
      %p202 = scmp.eq.s32.totalorder %s25, 1
      %p203 = por %p201, %p202
      %p205 = scmp.ne.s32.totalorder %s188, %s204
      %p206 = scmp.eq.s32.totalorder %s25, 0
      %p207 = por %p205, %p206
      %p208 = scmp.le.s32.totalorder 1, %s19
      %p209 = scmp.lt.s32.totalorder %s19, 3
      %p210 = pnand %p208, %p209
      %p211 = pneg %p210
      // Predicated region
      $region9: #{tpu_custom_call.1} parent=5 // pred_check
        _
      $region10: #{tpu_custom_call.1} parent=5 // pred_check_branch
        %213 = sbr.rel (%p210) target = $region12
      $region11: #{tpu_custom_call.1} parent=5 // pred_region
        %s214 = ssub.s32 %s19, 1
        // Predicated region
        $region13: #{tpu_custom_call.1} parent=11 // pred_check
          %p215 = pneg %p85
        $region14: #{tpu_custom_call.1} parent=11 // pred_check_branch
          %217 = sbr.rel (%p215) target = $region16
        $region15: #{tpu_custom_call.1} parent=11 // pred_region
          %p218 = scmp.lt.s32.totalorder %s29, 0
          %s219 = scalar_select %p218, %s29, 0
          %s220 = smul.addr %s219, 8
          %s221 = scalar_lea.vmem %s1, %s220
        $region16: #{tpu_custom_call.1} parent=11 // pred_fallthru
          _
        // Predicated region
        $region17: #{tpu_custom_call.1} parent=11 // pred_check
          %p222 = pneg %p106
        $region18: #{tpu_custom_call.1} parent=11 // pred_check_branch
          %224 = sbr.rel (%p222) target = $region20
        $region19: #{tpu_custom_call.1} parent=11 // pred_region
          _
        $region20: #{tpu_custom_call.1} parent=11 // pred_fallthru
          _
        // Predicated region
        $region21: #{tpu_custom_call.1} parent=11 // pred_check
          %p225 = pneg %p127
        $region22: #{tpu_custom_call.1} parent=11 // pred_check_branch
          %227 = sbr.rel (%p225) target = $region24
        $region23: #{tpu_custom_call.1} parent=11 // pred_region
          _
        $region24: #{tpu_custom_call.1} parent=11 // pred_fallthru
          _
        // Predicated region
        $region25: #{tpu_custom_call.1} parent=11 // pred_check
          %p228 = pneg %p148
        $region26: #{tpu_custom_call.1} parent=11 // pred_check_branch
          %230 = sbr.rel (%p228) target = $region28
        $region27: #{tpu_custom_call.1} parent=11 // pred_region
          _
        $region28: #{tpu_custom_call.1} parent=11 // pred_fallthru
          _
      $region12: #{tpu_custom_call.1} parent=5 // pred_fallthru
        _
      %p231 = scmp.lt.s32.totalorder %s19, 2
      // Predicated region
      $region29: #{tpu_custom_call.1} parent=5 // pred_check
        %p232 = pneg %p231
      $region30: #{tpu_custom_call.1} parent=5 // pred_check_branch
        %234 = sbr.rel (%p232) target = $region32
      $region31: #{tpu_custom_call.1} parent=5 // pred_region
        // Predicated region
        $region33: #{tpu_custom_call.1} parent=31 // pred_check
          %p235 = pneg %p53
        $region34: #{tpu_custom_call.1} parent=31 // pred_check_branch
          %237 = sbr.rel (%p235) target = $region36
        $region35: #{tpu_custom_call.1} parent=31 // pred_region
          %s238 = smul.u32 2, %s27
          %p239 = scmp.lt.s32.totalorder %s26, 1
          %s240 = scalar_select %p239, %s26, 1
          %p241 = scmp.lt.s32.totalorder %s238, 1
          %s242 = scalar_select %p241, %s238, 1
          %s243 = smul.addr %s242, 2
          %s244 = smul.addr %s240, 4
          %s245 = sadd.s32 %s243, %s244
          %s246 = smul.addr %s245, 8
          %s247 = scalar_lea.vmem %s0, %s246
          %s248 = smul.u32 2, %s27
        $region36: #{tpu_custom_call.1} parent=31 // pred_fallthru
          _
      $region32: #{tpu_custom_call.1} parent=5 // pred_fallthru
        _
      %p249 = scmp.le.s32.totalorder 1, %s19
      %p250 = scmp.lt.s32.totalorder %s19, 3
      %p251 = pnand %p249, %p250
      %p252 = pneg %p251
      // Predicated region
      $region37: #{tpu_custom_call.1} parent=5 // pred_check
        _
      $region38: #{tpu_custom_call.1} parent=5 // pred_check_branch
        %254 = sbr.rel (%p251) target = $region40
      $region39: #{tpu_custom_call.1} parent=5 // pred_region
        %s255 = ssub.s32 %s19, 1
        %s256 = smul.u32 2, %s29
        %p257 = scmp.lt.s32.totalorder %s28, 1
        %s258 = scalar_select %p257, %s28, 1
        %p259 = scmp.lt.s32.totalorder %s256, 1
        %s260 = scalar_select %p259, %s256, 1
        %s261 = smul.addr %s260, 2
        %s262 = smul.addr %s258, 4
        %s263 = sadd.s32 %s261, %s262
        %s264 = smul.addr %s263, 8
        %s265 = scalar_lea.vmem %s0, %s264
        %p266 = pneg %p59
        %p267 = pneg %p56
        %p268 = scmp.lt.s32.totalorder %s29, 0
        %s269 = scalar_select %p268, %s29, 0
        %s270 = smul.addr %s269, 8
        %s271 = scalar_lea.vmem %s1, %s270
        %p272 = pneg %p85
        %p273 = pneg %p82
        %p274 = pneg %p106
        %p275 = pneg %p103
        %p276 = pneg %p127
        %p277 = pneg %p124
        %p278 = pneg %p148
        %p279 = pneg %p145
        %p280 = pneg %p174
        %p281 = pneg %p171
        %s282 = sand.u32 %s161, 1
        %s283 = scalar_lea.sflag [#allocation4], %s282
        %s284 = sand.u32 %s161, 1
        %s285 = smul.addr %s284, 64
        %s286 = scalar_lea.vmem [#allocation3], %s285
        %p287 = pneg %p200
        %p288 = pneg %p197
        %s289 = sand.u32 %s187, 1
        %s290 = scalar_lea.sflag [#allocation6], %s289
        %s291 = sand.u32 %s187, 1
        %s292 = smul.addr %s291, 2
        %s293 = scalar_lea.vmem [#allocation5], %s292
        %s294 = smul.u32 2, %s29
        %p295 = scmp.lt.s32.totalorder %s28, 1
        %s296 = scalar_select %p295, %s28, 1
        %p297 = scmp.lt.s32.totalorder %s294, 1
        %s298 = scalar_select %p297, %s294, 1
        %s299 = smul.addr %s298, 2
        %s300 = smul.addr %s296, 4
        %s301 = sadd.s32 %s299, %s300
        %s302 = smul.addr %s301, 8
        %s303 = scalar_lea.vmem %s0, %s302
        %s304 = smul.u32 2, %s29
        %p305 = scmp.lt.s32.totalorder %s29, 0
        %s306 = scalar_select %p305, %s29, 0
        %s307 = smul.addr %s306, 8
        %s308 = scalar_lea.vmem %s1, %s307
        %v309 = vld [vmem:[%s303] sm:$0xff]
        %v310 = vld [vmem:[%s303 + $0x8] sm:$0xff]
        %v311 = vld [vmem:[%s303 + $0x10] sm:$0xff]
        %v312 = vld [vmem:[%s303 + $0x18] sm:$0xff]
        %v313 = vmul.f32 %v309, %v309
        %v314 = vmul.f32 %v310, %v310
        %v315 = vmul.f32 %v311, %v311
        %v316 = vmul.f32 %v312, %v312
        %v317 = vadd.f32 %v313, %v315
        %v318 = vrot.slane %v317, 4
        %v319 = vadd.f32 %v317, %v318
        %v320 = vrot.slane %v319, 2
        %v321 = vadd.f32 %v319, %v320
        %v322 = vrot.slane %v321, 1
        %v323 = vadd.f32 %v321, %v322
        %v324 = vadd.f32 %v314, %v316
        %v325 = vrot.slane %v324, 4
        %v326 = vadd.f32 %v324, %v325
        %v327 = vrot.slane %v326, 2
        %v328 = vadd.f32 %v326, %v327
        %v329 = vrot.slane %v328, 1
        %v330 = vadd.f32 %v328, %v329
        %p331 = scmp.eq.s32.totalorder %s29, 0
        // Predicated region
        $region41: #{tpu_custom_call.1} parent=39 // pred_check
          %p332 = pneg %p331
        $region42: #{tpu_custom_call.1} parent=39 // pred_check_branch
          %334 = sbr.rel (%p332) target = $region44
        $region43: #{tpu_custom_call.1} parent=39 // pred_region
          %v335 = vlaneseq
          %vm336 = vcmp.ge.s32.totalorder %v335, 0
          %vm337 = vcmp.lt.s32.totalorder %v335, 256
          %vm338 = vmand %vm336, %vm337
          %339 = vst.msk [vmem:[%s293] sm:$0x3] %vm338, 0.0
          %340 = vst [vmem:[#allocation2] sm:$0xff] 0.0
          %341 = vst [vmem:[#allocation2 + $0x8] sm:$0xff] 0.0
          %342 = vst [vmem:[#allocation2 + $0x10] sm:$0xff] 0.0
          %343 = vst [vmem:[#allocation2 + $0x18] sm:$0xff] 0.0
          %344 = vst [vmem:[#allocation2 + $0x20] sm:$0xff] 0.0
          %345 = vst [vmem:[#allocation2 + $0x28] sm:$0xff] 0.0
          %346 = vst [vmem:[#allocation2 + $0x30] sm:$0xff] 0.0
          %347 = vst [vmem:[#allocation2 + $0x38] sm:$0xff] 0.0
        $region44: #{tpu_custom_call.1} parent=39 // pred_fallthru
          _
        %v348 = vld [vmem:[%s293] sm:$0x3]
        %v351 = vrot.slane %v330, 7
        %vm352 = vcmask 1040384
        %v353 = vsel %vm352, %v323, %v351
        %v355 = vadd.f32 %v348, %v353
        %v356 = vlaneseq
        %vm357 = vcmp.ge.s32.totalorder %v356, 0
        %vm358 = vcmp.lt.s32.totalorder %v356, 256
        %vm359 = vmand %vm357, %vm358
        %360 = vst.msk [vmem:[%s293] sm:$0x3] %vm359, %v355
        %v361 = vld [vmem:[%s4] sm:$0x3]
        %366 = vrot.lane.b32.xlu0 %v309, 127
        %v367 = vpop.permute.xlu0 %366
        %368 = vrot.lane.b32.xlu0 %v310, 127
        %v369 = vpop.permute.xlu0 %368
        %370 = vrot.lane.b32.xlu0 %v311, 127
        %v371 = vpop.permute.xlu0 %370
        %372 = vrot.lane.b32.xlu0 %v312, 127
        %v373 = vpop.permute.xlu0 %372
        %vm374 = vcmask 1039360
        %v375 = vsel %vm374, %v367, %v369
        %v376 = vsel %vm374, %v371, %v373
        %v381 = vsel %vm374, %v369, 0.0
        %v382 = vsel %vm374, %v373, 0.0
        %vm383 = vcmp.le.s32.totalorder %v361, 14
        %v384 = vsel %vm383, 1, 0
        %v385 = vperm.slane %v384, 0
        %v386 = vperm.slane %v384, 1
        %vm387 = vcmp.eq.s32.totalorder %v385, 1
        %vm388 = vcmp.eq.s32.totalorder %v386, 1
        %v389 = vsel %vm387, %v375, 0.0
        %v390 = vsel %vm388, %v381, 0.0
        %v391 = vsel %vm387, %v376, 0.0
        %v392 = vsel %vm388, %v382, 0.0
        %393 = vrot.lane.b32.xlu0 %v309, 1
        %v394 = vpop.permute.xlu0 %393
        %395 = vrot.lane.b32.xlu0 %v310, 1
        %v396 = vpop.permute.xlu0 %395
        %397 = vrot.lane.b32.xlu0 %v311, 1
        %v398 = vpop.permute.xlu0 %397
        %399 = vrot.lane.b32.xlu0 %v312, 1
        %v400 = vpop.permute.xlu0 %399
        %vm401 = vcmask 7168
        %v402 = vsel %vm401, %v394, %v396
        %v403 = vsel %vm401, %v398, %v400
        %v408 = vsel %vm401, 0.0, %v394
        %v409 = vsel %vm401, 0.0, %v398
        %vm410 = vcmp.ge.s32.totalorder %v361, 1
        %v411 = vsel %vm410, 1, 0
        %v412 = vperm.slane %v411, 0
        %v413 = vperm.slane %v411, 1
        %vm414 = vcmp.eq.s32.totalorder %v412, 1
        %vm415 = vcmp.eq.s32.totalorder %v413, 1
        %v416 = vsel %vm414, %v408, 0.0
        %v417 = vsel %vm415, %v402, 0.0
        %v418 = vsel %vm414, %v409, 0.0
        %v419 = vsel %vm415, %v403, 0.0
        %v420 = vadd.f32 %v309, %v389
        %v421 = vadd.f32 %v310, %v390
        %v422 = vadd.f32 %v311, %v391
        %v423 = vadd.f32 %v312, %v392
        %v424 = vadd.f32 %v420, %v416
        %v425 = vadd.f32 %v421, %v417
        %v426 = vadd.f32 %v422, %v418
        %v427 = vadd.f32 %v423, %v419
        %432 = vrot.lane.b32.xlu0 %v424, 112
        %v433 = vpop.permute.xlu0 %432
        %434 = vrot.lane.b32.xlu0 %v425, 112
        %v435 = vpop.permute.xlu0 %434
        %436 = vrot.lane.b32.xlu0 %v426, 112
        %v437 = vpop.permute.xlu0 %436
        %438 = vrot.lane.b32.xlu0 %v427, 112
        %v439 = vpop.permute.xlu0 %438
        %vm440 = vcmask 916480
        %v441 = vsel %vm440, %v433, %v435
        %v442 = vsel %vm440, %v437, %v439
        %v447 = vsel %vm440, %v435, 0.0
        %v448 = vsel %vm440, %v439, 0.0
        %449 = vrot.lane.b32.xlu0 %v424, 16
        %v450 = vpop.permute.xlu0 %449
        %451 = vrot.lane.b32.xlu0 %v425, 16
        %v452 = vpop.permute.xlu0 %451
        %453 = vrot.lane.b32.xlu0 %v426, 16
        %v454 = vpop.permute.xlu0 %453
        %455 = vrot.lane.b32.xlu0 %v427, 16
        %v456 = vpop.permute.xlu0 %455
        %vm457 = vcmask 130048
        %v458 = vsel %vm457, %v450, %v452
        %v459 = vsel %vm457, %v454, %v456
        %v464 = vsel %vm457, 0.0, %v450
        %v465 = vsel %vm457, 0.0, %v454
        %v466 = vadd.f32 %v424, %v441
        %v467 = vadd.f32 %v425, %v447
        %v468 = vadd.f32 %v426, %v442
        %v469 = vadd.f32 %v427, %v448
        %v470 = vadd.f32 %v466, %v464
        %v471 = vadd.f32 %v467, %v458
        %v472 = vadd.f32 %v468, %v465
        %v473 = vadd.f32 %v469, %v459
        %v474 = vld [vmem:[#allocation2] sm:$0xff]
        %v475 = vld [vmem:[#allocation2 + $0x8] sm:$0xff]
        %v476 = vld [vmem:[#allocation2 + $0x10] sm:$0xff]
        %v477 = vld [vmem:[#allocation2 + $0x18] sm:$0xff]
        %v478 = vld [vmem:[#allocation2 + $0x20] sm:$0xff]
        %v479 = vld [vmem:[#allocation2 + $0x28] sm:$0xff]
        %v480 = vld [vmem:[#allocation2 + $0x30] sm:$0xff]
        %v481 = vld [vmem:[#allocation2 + $0x38] sm:$0xff]
        %v482 = vld [vmem:[%s308] sm:$0xff]
        %v483 = vld [vmem:[%s308 + $0x8] sm:$0xff]
        %v484 = vld [vmem:[%s308 + $0x10] sm:$0xff]
        %v485 = vld [vmem:[%s308 + $0x18] sm:$0xff]
        %v487 = vsel %vm457, %v482, 0
        %v490 = vsel %vm457, %v483, 0
        %v493 = vsel %vm457, %v484, 0
        %v496 = vsel %vm457, %v485, 0
        %498 = vmatpush.msra.mxu0 0.0
        %499 = vmatpush.msra.mxu0 0.0
        %500 = vmatpush.msra.mxu0 0.0
        %501 = vmatpush.msra.mxu0 0.0
        %502 = vmatpush.msra.mxu0 0.0
        %503 = vmatpush.msra.mxu0 0.0
        %504 = vmatpush.msra.mxu0 0.0
        %505 = vmatpush.msra.mxu0 0.0
        %506 = vmatpush.msra.mxu0 0.0
        %507 = vmatpush.msra.mxu0 0.0
        %508 = vmatpush.msra.mxu0 0.0
        %509 = vmatpush.msra.mxu0 0.0
        %510 = vmatpush.msra.mxu0 0.0
        %511 = vmatpush.msra.mxu0 0.0
        %512 = vmatpush.msra.mxu0 %v472
        %513 = vmatpush.msra.mxu0 %v470
        %514 = vmatmul.f32.gmra.mxu0 %v487
        %v515 = vpop.f32.mrf.mxu0
        %v516 = vadd.f32 0.0, %v515
        %517 = vmatmul.f32.gmra.mxu0 %v490
        %v518 = vpop.f32.mrf.mxu0
        %v519 = vadd.f32 0.0, %v518
        %520 = vmatmul.f32.gmra.mxu0 %v493
        %v521 = vpop.f32.mrf.mxu0
        %v522 = vadd.f32 0.0, %v521
        %523 = vmatmul.f32.gmra.mxu0 %v496
        %v524 = vpop.f32.mrf.mxu0
        %v525 = vadd.f32 0.0, %v524
        %526 = vdwg.mxu0
        %527 = vmatpush.msra.mxu0 0.0
        %528 = vmatpush.msra.mxu0 0.0
        %529 = vmatpush.msra.mxu0 0.0
        %530 = vmatpush.msra.mxu0 0.0
        %531 = vmatpush.msra.mxu0 0.0
        %532 = vmatpush.msra.mxu0 0.0
        %533 = vmatpush.msra.mxu0 0.0
        %534 = vmatpush.msra.mxu0 0.0
        %535 = vmatpush.msra.mxu0 0.0
        %536 = vmatpush.msra.mxu0 0.0
        %537 = vmatpush.msra.mxu0 0.0
        %538 = vmatpush.msra.mxu0 0.0
        %539 = vmatpush.msra.mxu0 0.0
        %540 = vmatpush.msra.mxu0 0.0
        %541 = vmatpush.msra.mxu0 %v473
        %542 = vmatpush.msra.mxu0 %v471
        %543 = vmatmul.f32.gmra.mxu0 %v487
        %v544 = vpop.f32.mrf.mxu0
        %v545 = vadd.f32 0.0, %v544
        %546 = vmatmul.f32.gmra.mxu0 %v490
        %v547 = vpop.f32.mrf.mxu0
        %v548 = vadd.f32 0.0, %v547
        %549 = vmatmul.f32.gmra.mxu0 %v493
        %v550 = vpop.f32.mrf.mxu0
        %v551 = vadd.f32 0.0, %v550
        %552 = vmatmul.f32.gmra.mxu0 %v496
        %v553 = vpop.f32.mrf.mxu0
        %v554 = vadd.f32 0.0, %v553
        %555 = vdwg.mxu0
        %v556 = vadd.f32 %v474, %v516
        %v557 = vadd.f32 %v475, %v545
        %v558 = vadd.f32 %v476, %v519
        %v559 = vadd.f32 %v477, %v548
        %v560 = vadd.f32 %v478, %v522
        %v561 = vadd.f32 %v479, %v551
        %v562 = vadd.f32 %v480, %v525
        %v563 = vadd.f32 %v481, %v554
        %564 = vst [vmem:[#allocation2] sm:$0xff] %v556
        %565 = vst [vmem:[#allocation2 + $0x8] sm:$0xff] %v557
        %566 = vst [vmem:[#allocation2 + $0x10] sm:$0xff] %v558
        %567 = vst [vmem:[#allocation2 + $0x18] sm:$0xff] %v559
        %568 = vst [vmem:[#allocation2 + $0x20] sm:$0xff] %v560
        %569 = vst [vmem:[#allocation2 + $0x28] sm:$0xff] %v561
        %570 = vst [vmem:[#allocation2 + $0x30] sm:$0xff] %v562
        %571 = vst [vmem:[#allocation2 + $0x38] sm:$0xff] %v563
        // Predicated region
        $region45: #{tpu_custom_call.1} parent=39 // pred_check
          %p572 = pneg %p331
        $region46: #{tpu_custom_call.1} parent=39 // pred_check_branch
          %574 = sbr.rel (%p572) target = $region48
        $region47: #{tpu_custom_call.1} parent=39 // pred_region
          %v575 = vld [vmem:[#allocation2] sm:$0xff]
          %v576 = vld [vmem:[#allocation2 + $0x8] sm:$0xff]
          %v577 = vld [vmem:[#allocation2 + $0x10] sm:$0xff]
          %v578 = vld [vmem:[#allocation2 + $0x18] sm:$0xff]
          %v579 = vld [vmem:[#allocation2 + $0x20] sm:$0xff]
          %v580 = vld [vmem:[#allocation2 + $0x28] sm:$0xff]
          %v581 = vld [vmem:[#allocation2 + $0x30] sm:$0xff]
          %v582 = vld [vmem:[#allocation2 + $0x38] sm:$0xff]
          %v583 = vld [vmem:[%s3] sm:$0x3]
          %v585 = vperm.slane %v583, 0
          %v586 = vperm.slane %v583, 1
          %v589 = vmul.f32 %v575, %v585
          %v590 = vmul.f32 %v576, %v586
          %v591 = vmul.f32 %v577, %v585
          %v592 = vmul.f32 %v578, %v586
          %v593 = vmul.f32 %v579, %v585
          %v594 = vmul.f32 %v580, %v586
          %v595 = vmul.f32 %v581, %v585
          %v596 = vmul.f32 %v582, %v586
          %v597 = vld [vmem:[%s2] sm:$0xff]
          %v598 = vld [vmem:[%s2 + $0x8] sm:$0xff]
          %v599 = vld [vmem:[%s2 + $0x10] sm:$0xff]
          %v600 = vld [vmem:[%s2 + $0x18] sm:$0xff]
          %602 = vset.pattern.permute.xlu0 0
          %603 = vperm.xlu0 %602, %v597
          %v604 = vpop.permute.xlu0 %603
          %607 = vset.pattern.permute.xlu0 0
          %608 = vperm.xlu0 %607, %v598
          %v609 = vpop.permute.xlu0 %608
          %612 = vset.pattern.permute.xlu0 0
          %613 = vperm.xlu0 %612, %v599
          %v614 = vpop.permute.xlu0 %613
          %617 = vset.pattern.permute.xlu0 0
          %618 = vperm.xlu0 %617, %v600
          %v619 = vpop.permute.xlu0 %618
          %v621 = vadd.f32 %v589, %v604
          %v622 = vadd.f32 %v590, %v604
          %v623 = vadd.f32 %v591, %v609
          %v624 = vadd.f32 %v592, %v609
          %v625 = vadd.f32 %v593, %v614
          %v626 = vadd.f32 %v594, %v614
          %v627 = vadd.f32 %v595, %v619
          %v628 = vadd.f32 %v596, %v619
          %629 = vst [vmem:[%s286] sm:$0xff] %v621
          %630 = vst [vmem:[%s286 + $0x8] sm:$0xff] %v622
          %631 = vst [vmem:[%s286 + $0x10] sm:$0xff] %v623
          %632 = vst [vmem:[%s286 + $0x18] sm:$0xff] %v624
          %633 = vst [vmem:[%s286 + $0x20] sm:$0xff] %v625
          %634 = vst [vmem:[%s286 + $0x28] sm:$0xff] %v626
          %635 = vst [vmem:[%s286 + $0x30] sm:$0xff] %v627
          %636 = vst [vmem:[%s286 + $0x38] sm:$0xff] %v628
          %v637 = vld [vmem:[%s293] sm:$0x3]
          %v638 = vadd.f32 %v637, 1e-10
          %v639 = vrsqrt.pop %v638
          %v640 = vmul.f32 %v639, %v638
          %v641 = vmul.f32 %v640, %v639
          %v642 = vmul.f32 0.5, %v641
          %v643 = vsub.f32 1.5, %v642
          %v644 = vmul.f32 %v639, %v643
          %v645 = vmul.f32 %v638, %v644
          %vm646 = vcmp.eq.f32.partialorder %v638, inf
          %v647 = vsel %vm646, %v638, %v645
          %vm648 = vcmp.eq.f32.partialorder %v638, 0.0
          %v649 = vand.u32 %v638, 2147483648
          %v650 = vsel %vm648, %v649, %v647
          %651 = vst.msk [vmem:[%s293] sm:$0x3] %vm359, %v650
        $region48: #{tpu_custom_call.1} parent=39 // pred_fallthru
          _
        %s652 = sand.u32 %s161, 1
        %s653 = scalar_lea.sflag [#allocation4], %s652
        %s654 = sand.u32 %s161, 1
        %s655 = smul.addr %s654, 64
        %s656 = scalar_lea.vmem [#allocation3], %s655
        %s657 = sand.u32 %s187, 1
        %s658 = scalar_lea.sflag [#allocation6], %s657
        %s659 = sand.u32 %s187, 1
        %s660 = smul.addr %s659, 2
        %s661 = scalar_lea.vmem [#allocation5], %s660
        // Predicated region
        $region49: #{tpu_custom_call.1} parent=39 // pred_check
          %p662 = pneg %p171
        $region50: #{tpu_custom_call.1} parent=39 // pred_check_branch
          %664 = sbr.rel (%p662) target = $region52
        $region51: #{tpu_custom_call.1} parent=39 // pred_region
          %666 = vsyncadd %s653, 0
          %s667 = smul.addr %s28, 8
          %s668 = smul.addr %s667, 8
          %s669 = scalar_lea.hbm %s5, %s668
          %s670 = sshll.u32 %s656, 4
          %s671 = int_to_ptr.vmem [resolvable:$true] %s670
          %s672 = sshll.u32 %s669, 4
          %s673 = int_to_ptr.hbm [resolvable:$true] %s672
          %678 = dma.vmem_to_hbm [thread:$0]  %s671, 1024, %s673, %s653, 256, 256, 16
        $region52: #{tpu_custom_call.1} parent=39 // pred_fallthru
          _
        // Predicated region
        $region53: #{tpu_custom_call.1} parent=39 // pred_check
          %p679 = pneg %p197
        $region54: #{tpu_custom_call.1} parent=39 // pred_check_branch
          %681 = sbr.rel (%p679) target = $region56
        $region55: #{tpu_custom_call.1} parent=39 // pred_region
          %683 = vsyncadd %s658, 0
          %s684 = smul.addr %s28, 2
          %s685 = scalar_lea.hbm %s6, %s684
          %s687 = sshll.u32 %s661, 4
          %s688 = int_to_ptr.vmem [resolvable:$true] %s687
          %s689 = sshll.u32 %s685, 4
          %s690 = int_to_ptr.hbm [resolvable:$true] %s689
          %692 = dma.vmem_to_hbm [thread:$0]  %s688, 32, %s690, %s658
        $region56: #{tpu_custom_call.1} parent=39 // pred_fallthru
          _
      $region40: #{tpu_custom_call.1} parent=5 // pred_fallthru
        _
      %p693 = scmp.le.s32.totalorder 2, %s19
      // Predicated region
      $region57: #{tpu_custom_call.1} parent=5 // pred_check
        %p694 = pneg %p693
      $region58: #{tpu_custom_call.1} parent=5 // pred_check_branch
        %696 = sbr.rel (%p694) target = $region60
      $region59: #{tpu_custom_call.1} parent=5 // pred_region
        %s697 = ssub.s32 %s19, 2
        // Predicated region
        $region61: #{tpu_custom_call.1} parent=59 // pred_check
          %p698 = pneg %p177
        $region62: #{tpu_custom_call.1} parent=59 // pred_check_branch
          %700 = sbr.rel (%p698) target = $region64
        $region63: #{tpu_custom_call.1} parent=59 // pred_region
          %s701 = sand.u32 %s162, 1
          %s702 = scalar_lea.sflag [#allocation4], %s701
          %s703 = sand.u32 %s162, 1
          %s704 = smul.addr %s703, 64
          %s705 = scalar_lea.vmem [#allocation3], %s704
          %707 = dma.done %s702, 1024
        $region64: #{tpu_custom_call.1} parent=59 // pred_fallthru
          _
        // Predicated region
        $region65: #{tpu_custom_call.1} parent=59 // pred_check
          %p708 = pneg %p203
        $region66: #{tpu_custom_call.1} parent=59 // pred_check_branch
          %710 = sbr.rel (%p708) target = $region68
        $region67: #{tpu_custom_call.1} parent=59 // pred_region
          %s711 = sand.u32 %s188, 1
          %s712 = scalar_lea.sflag [#allocation6], %s711
          %s713 = sand.u32 %s188, 1
          %s714 = smul.addr %s713, 2
          %s715 = scalar_lea.vmem [#allocation5], %s714
          %717 = dma.done %s712, 32
        $region68: #{tpu_custom_call.1} parent=59 // pred_fallthru
          _
      $region60: #{tpu_custom_call.1} parent=5 // pred_fallthru
        _
    $region6: #{tpu_custom_call.1} parent=1 // loop_footer
      %s23 = sadd.s32 1, %s19
    $region7: #{tpu_custom_call.1} parent=1 // loop_footer_branch
      %18 = sbr.rel target = $region3
    $region8: #{tpu_custom_call.1} parent=1 // loop_exit
      _
    %718 = vsyncpa [#allocation4], 1
    %s719 = scalar_lea.sflag [#allocation4], 1
    %720 = vsyncpa %s719, 1
    %721 = vsyncpa [#allocation6], 1
    %s722 = scalar_lea.sflag [#allocation6], 1
    %723 = vsyncpa %s722, 1

</llo_original>
